<compile_context>
chip_gen: v6e
topology: v6e:2x2x1
jax: 0.10.0
libtpu: 0.0.40
codegen_flags: <defaults>
</compile_context>

<pallas_src>
import jax
import jax.numpy as jnp
from jax.experimental import pallas as pl
from jax.experimental.pallas import tpu as pltpu


def f2g_kernel(x_ref, rhs_ref, out_ref, m_sc, l_sc, acc_sc):
    """Online-softmax featuremaps->graph projection.

    x_ref   : (1, C, T)                  feature-map tile, HW on the lane axis
    rhs_ref : (nodes_pad + hidden, C)    fused [pre_fea^T (padded) ; weight^T]
    out_ref : (1, nodes_pad, hidden)
    m_sc/l_sc : (nodes_pad, 1) f32       running max / softmax denominator
    acc_sc  : (nodes_pad, hidden) f32    running (softmax^T @ weight_node) numerator
    """
    t = pl.program_id(1)
    nodes_pad = out_ref.shape[1]

    @pl.when(t == 0)
    def _():
        m_sc[...] = jnp.full(m_sc.shape, -jnp.inf, m_sc.dtype)
        l_sc[...] = jnp.zeros(l_sc.shape, l_sc.dtype)
        acc_sc[...] = jnp.zeros(acc_sc.shape, acc_sc.dtype)

    x = x_ref[0]                                                        # (C, T)
    # One fused MXU pass for both projections; output is lane-dense in T.
    proj = jnp.dot(rhs_ref[...], x, preferred_element_type=jnp.float32)
    fea = proj[:nodes_pad, :]                                           # (nodes_pad, T)
    wn = proj[nodes_pad:, :]                                            # (hidden, T)

    # Online softmax over the HW (lane) axis.
    m_new = jnp.maximum(m_sc[...], jnp.max(fea, axis=-1, keepdims=True))
    alpha = jnp.exp(m_sc[...] - m_new)                                  # (nodes_pad, 1)
    p = jnp.exp(fea - m_new)                                            # (nodes_pad, T)
    l_sc[...] = alpha * l_sc[...] + jnp.sum(p, axis=-1, keepdims=True)
    # Contract the HW axis of p and wn directly (== softmax^T @ weight_node),
    # no explicit transpose materialization.
    acc_sc[...] = alpha * acc_sc[...] + jax.lax.dot_general(
        p, wn, (((1,), (1,)), ((), ())), preferred_element_type=jnp.float32)
    m_sc[...] = m_new

    @pl.when(t == pl.num_programs(1) - 1)
    def _():
        # Exact reciprocal (only nodes_pad values): precision > speed here.
        g = acc_sc[...] * pl.reciprocal(l_sc[...], approx=False)
        out_ref[0] = jnp.maximum(g, 0.0).astype(out_ref.dtype)          # ReLU


def _choose_hw_tile(hw, c, max_tile=2048, vmem_budget_bytes=8 * 1024 * 1024):
    """Largest 128-multiple HW tile that divides hw and fits a VMEM budget."""
    per_row_bytes = 2 * 4 * max(c, 1)  # double-buffered f32 x block, per HW element
    cap = min(max_tile, max(128, (vmem_budget_bytes // per_row_bytes) // 128 * 128))
    if hw <= cap:
        return hw
    for t in range(cap, 127, -128):
        if hw % t == 0:
            return t
    return hw  # no clean divisor: fall back to a single full-HW block


def featuremaps_to_graph_pallas(x_nc_hw, rhs_t, nodes_pad, hidden):
    n, c, hw = x_nc_hw.shape
    assert rhs_t.shape == (nodes_pad + hidden, c)
    tile = _choose_hw_tile(hw, c)
    num_tiles = hw // tile
    return pl.pallas_call(
        f2g_kernel,
        out_shape=jax.ShapeDtypeStruct((n, nodes_pad, hidden), jnp.float32),
        grid=(n, num_tiles),
        in_specs=[
            pl.BlockSpec((1, c, tile), lambda b, t: (b, 0, t)),
            pl.BlockSpec((nodes_pad + hidden, c), lambda b, t: (0, 0)),
        ],
        out_specs=pl.BlockSpec((1, nodes_pad, hidden), lambda b, t: (b, 0, 0)),
        scratch_shapes=[
            pltpu.VMEM((nodes_pad, 1), jnp.float32),       # running max
            pltpu.VMEM((nodes_pad, 1), jnp.float32),       # running denom
            pltpu.VMEM((nodes_pad, hidden), jnp.float32),  # running numerator
        ],
        compiler_params=pltpu.CompilerParams(
            dimension_semantics=("parallel", "arbitrary")),
    )(x_nc_hw, rhs_t)


def leaky_relu(x, negative_slope):
    return jnp.where(x >= 0, x, negative_slope * x)


def pre_fea_learn(source_pre_fea, pre_fea, w1, b1, w2, b2):
    # nn.Sequential(Linear(S,S), LeakyReLU(True), Linear(S,nodes), LeakyReLU(True))
    # NOTE: nn.LeakyReLU(True) sets negative_slope=1.0 in PyTorch (identity);
    # reproduced exactly to match the source module.
    h = leaky_relu(source_pre_fea @ w1.T + b1, 1.0)   # (C, S)
    h = leaky_relu(h @ w2.T + b2, 1.0)                # (C, nodes)
    return pre_fea + h                                # self.pre_fea.data + pre_fea


def forward(x_nchw, source_pre_fea, params):
    # Parameter/glue (plain JAX): pre_fea transfer MLP + layout prep for the kernel.
    pre_fea_eff = pre_fea_learn(
        source_pre_fea, params["pre_fea"],
        params["lin1_w"], params["lin1_b"], params["lin2_w"], params["lin2_b"],
    )
    n, c, h, w = x_nchw.shape
    nodes = pre_fea_eff.shape[1]
    hidden = params["weight"].shape[1]
    nodes_pad = -(-nodes // 8) * 8

    # Keep HW on the lane axis: plain NCHW flatten, NO (0,2,1) transpose HBM pass.
    x1 = x_nchw.reshape(n, c, h * w)                                  # (N, C, HW)
    # Fused, sublane-aligned rhs: [pre_fea^T padded to 8 rows ; weight^T].
    pre_t = jnp.pad(pre_fea_eff.T, ((0, nodes_pad - nodes), (0, 0)))  # (nodes_pad, C)
    rhs_t = jnp.concatenate([pre_t, params["weight"].T], axis=0)      # (nodes_pad+hidden, C)

    out = featuremaps_to_graph_pallas(x1, rhs_t, nodes_pad, hidden)
    return out[:, :nodes, :]                                          # drop node padding


def forward_ref(x_nchw, source_pre_fea, params):
    # Pure-JAX reference mirroring the PyTorch forward.
    pre_fea_eff = pre_fea_learn(
        source_pre_fea, params["pre_fea"],
        params["lin1_w"], params["lin1_b"], params["lin2_w"], params["lin2_b"],
    )
    n, c, h, w = x_nchw.shape
    x1 = x_nchw.reshape(n, c, h * w).transpose(0, 2, 1)               # (N, HW, C)
    fea = x1 @ pre_fea_eff                                            # (N, HW, nodes)
    wn = x1 @ params["weight"]                                        # (N, HW, hidden)
    s = jax.nn.softmax(fea, axis=1)
    return jnp.maximum(jnp.einsum("bqn,bqh->bnh", s, wn), 0.0)


if __name__ == "__main__":
    # Small shapes consistent with the module.
    N, C, H, W = 2, 32, 8, 8
    NODES, HIDDEN, SOURCE_NODES = 7, 32, 20

    key = jax.random.PRNGKey(0)
    ks = jax.random.split(key, 8)
    params = {
        "pre_fea": jax.random.normal(ks[0], (C, NODES), jnp.float32) * 0.1,
        "weight": jax.random.normal(ks[1], (C, HIDDEN), jnp.float32) * 0.1,
        "lin1_w": jax.random.normal(ks[2], (SOURCE_NODES, SOURCE_NODES), jnp.float32) * 0.1,
        "lin1_b": jax.random.normal(ks[3], (SOURCE_NODES,), jnp.float32) * 0.1,
        "lin2_w": jax.random.normal(ks[4], (NODES, SOURCE_NODES), jnp.float32) * 0.1,
        "lin2_b": jax.random.normal(ks[5], (NODES,), jnp.float32) * 0.1,
    }
    x = jax.random.normal(ks[6], (N, C, H, W), jnp.float32)
    source_pre_fea = jax.random.normal(ks[7], (C, SOURCE_NODES), jnp.float32) * 0.1

    out = jax.block_until_ready(forward(x, source_pre_fea, params))
    ref = jax.block_until_ready(forward_ref(x, source_pre_fea, params))

    assert out.shape == (N, NODES, HIDDEN), out.shape
    assert jnp.allclose(out, ref, atol=1e-4, rtol=1e-4), "mismatch vs reference"
    print("KERNEL_OK")
</pallas_src>

<mosaic_0001>
module attributes {stable_mosaic.version = 11 : i64} {
  func.func @f2g_kernel(%arg0: i32, %arg1: i32, %arg2: memref<1x32x64xf32, #tpu.memory_space<vmem>>, %arg3: memref<40x32xf32, #tpu.memory_space<vmem>>, %arg4: memref<1x8x32xf32, #tpu.memory_space<vmem>>, %arg5: memref<8x1xf32, #tpu.memory_space<vmem>>, %arg6: memref<8x1xf32, #tpu.memory_space<vmem>>, %arg7: memref<8x32xf32, #tpu.memory_space<vmem>>) attributes {dimension_semantics = [#tpu.dimension_semantics<parallel>, #tpu.dimension_semantics<arbitrary>], iteration_bounds = array<i64: 2, 1>, scalar_prefetch = 0 : i64, scratch_operands = 3 : i64, tpu.core_type = #tpu.core_type<tc>, window_params = [{transform_indices = @transform_0, window_bounds = array<i64: 1, 32, 64>}, {pipeline_mode = #tpu.pipeline_mode<synchronous>, transform_indices = @transform_1, window_bounds = array<i64: 40, 32>}, {transform_indices = @transform_2, window_bounds = array<i64: 1, 8, 32>}]} {
    %c0_i32 = arith.constant 0 : i32
    %0 = arith.cmpi eq, %arg1, %c0_i32 : i32
    %1 = arith.extui %0 : i1 to i32
    %c0_i32_0 = arith.constant 0 : i32
    %2 = arith.cmpi ne, %1, %c0_i32_0 : i32
    scf.if %2 {
      %cst_24 = arith.constant 0xFF800000 : f32
      %35 = vector.broadcast %cst_24 : f32 to vector<8x1xf32>
      %c0_25 = arith.constant 0 : index
      %c0_26 = arith.constant 0 : index
      %36 = vector.load %arg5[%c0_25, %c0_26] : memref<8x1xf32, #tpu.memory_space<vmem>>, vector<8x1xf32>
      tpu.vector_store %arg5[%c0_25, %c0_26], %35 {strides = array<i32>} : memref<8x1xf32, #tpu.memory_space<vmem>>, vector<8x1xf32>,
      %cst_27 = arith.constant 0.000000e+00 : f32
      %37 = vector.broadcast %cst_27 : f32 to vector<8x1xf32>
      %c0_28 = arith.constant 0 : index
      %c0_29 = arith.constant 0 : index
      %38 = vector.load %arg6[%c0_28, %c0_29] : memref<8x1xf32, #tpu.memory_space<vmem>>, vector<8x1xf32>
      tpu.vector_store %arg6[%c0_28, %c0_29], %37 {strides = array<i32>} : memref<8x1xf32, #tpu.memory_space<vmem>>, vector<8x1xf32>,
      %cst_30 = arith.constant 0.000000e+00 : f32
      %39 = vector.broadcast %cst_30 : f32 to vector<8x32xf32>
      %c0_31 = arith.constant 0 : index
      %c0_32 = arith.constant 0 : index
      %40 = vector.load %arg7[%c0_31, %c0_32] : memref<8x32xf32, #tpu.memory_space<vmem>>, vector<8x32xf32>
      tpu.vector_store %arg7[%c0_31, %c0_32], %39 {strides = array<i32>} : memref<8x32xf32, #tpu.memory_space<vmem>>, vector<8x32xf32>,
    } else {
    }
    %c0 = arith.constant 0 : index
    %c0_1 = arith.constant 0 : index
    %c0_2 = arith.constant 0 : index
    %3 = vector.load %arg2[%c0, %c0_1, %c0_2] : memref<1x32x64xf32, #tpu.memory_space<vmem>>, vector<1x32x64xf32>
    %4 = vector.shape_cast %3 : vector<1x32x64xf32> to vector<32x64xf32>
    %c0_3 = arith.constant 0 : index
    %c0_4 = arith.constant 0 : index
    %5 = vector.load %arg3[%c0_3, %c0_4] : memref<40x32xf32, #tpu.memory_space<vmem>>, vector<40x32xf32>
    %cst = arith.constant dense<0.000000e+00> : vector<40x64xf32>
    %6 = tpu.matmul %5, %4, %cst {dimension_numbers = #tpu.dot_dimension_numbers<[1], [0], [0], [1], [0, 0, 1, 1], [], []>} : vector<40x32xf32>, vector<32x64xf32>, vector<40x64xf32> -> vector<40x64xf32>
    %7 = vector.extract_strided_slice %6 {offsets = [0, 0], sizes = [8, 64], strides = [1, 1]} : vector<40x64xf32> to vector<8x64xf32>
    %8 = vector.extract_strided_slice %6 {offsets = [8, 0], sizes = [32, 64], strides = [1, 1]} : vector<40x64xf32> to vector<32x64xf32>
    %c0_5 = arith.constant 0 : index
    %c0_6 = arith.constant 0 : index
    %9 = vector.load %arg5[%c0_5, %c0_6] : memref<8x1xf32, #tpu.memory_space<vmem>>, vector<8x1xf32>
    %cst_7 = arith.constant dense<0xFF800000> : vector<8xf32>
    %10 = vector.multi_reduction <maximumf>, %7, %cst_7 [1] : vector<8x64xf32> to vector<8xf32>
    %11 = vector.shape_cast %10 : vector<8xf32> to vector<8x1xf32>
    %12 = arith.maximumf %9, %11 : vector<8x1xf32>
    %c0_8 = arith.constant 0 : index
    %c0_9 = arith.constant 0 : index
    %13 = vector.load %arg5[%c0_8, %c0_9] : memref<8x1xf32, #tpu.memory_space<vmem>>, vector<8x1xf32>
    %14 = arith.subf %13, %12 : vector<8x1xf32>
    %15 = math.exp %14 : vector<8x1xf32>
    %16 = vector.broadcast %12 : vector<8x1xf32> to vector<8x64xf32>
    %17 = arith.subf %7, %16 : vector<8x64xf32>
    %18 = math.exp %17 : vector<8x64xf32>
    %c0_10 = arith.constant 0 : index
    %c0_11 = arith.constant 0 : index
    %19 = vector.load %arg6[%c0_10, %c0_11] : memref<8x1xf32, #tpu.memory_space<vmem>>, vector<8x1xf32>
    %20 = arith.mulf %15, %19 : vector<8x1xf32>
    %cst_12 = arith.constant dense<0.000000e+00> : vector<8xf32>
    %21 = vector.multi_reduction <add>, %18, %cst_12 [1] : vector<8x64xf32> to vector<8xf32>
    %22 = vector.shape_cast %21 : vector<8xf32> to vector<8x1xf32>
    %23 = arith.addf %20, %22 : vector<8x1xf32>
    %c0_13 = arith.constant 0 : index
    %c0_14 = arith.constant 0 : index
    %24 = vector.load %arg6[%c0_13, %c0_14] : memref<8x1xf32, #tpu.memory_space<vmem>>, vector<8x1xf32>
    tpu.vector_store %arg6[%c0_13, %c0_14], %23 {strides = array<i32>} : memref<8x1xf32, #tpu.memory_space<vmem>>, vector<8x1xf32>,
    %c0_15 = arith.constant 0 : index
    %c0_16 = arith.constant 0 : index
    %25 = vector.load %arg7[%c0_15, %c0_16] : memref<8x32xf32, #tpu.memory_space<vmem>>, vector<8x32xf32>
    %26 = vector.broadcast %15 : vector<8x1xf32> to vector<8x32xf32>
    %27 = arith.mulf %26, %25 : vector<8x32xf32>
    %cst_17 = arith.constant dense<0.000000e+00> : vector<8x32xf32>
    %28 = tpu.matmul %18, %8, %cst_17 {dimension_numbers = #tpu.dot_dimension_numbers<[1], [1], [0], [0], [0, 0, 1, 0], [], []>} : vector<8x64xf32>, vector<32x64xf32>, vector<8x32xf32> -> vector<8x32xf32>
    %29 = arith.addf %27, %28 : vector<8x32xf32>
    %c0_18 = arith.constant 0 : index
    %c0_19 = arith.constant 0 : index
    %30 = vector.load %arg7[%c0_18, %c0_19] : memref<8x32xf32, #tpu.memory_space<vmem>>, vector<8x32xf32>
    tpu.vector_store %arg7[%c0_18, %c0_19], %29 {strides = array<i32>} : memref<8x32xf32, #tpu.memory_space<vmem>>, vector<8x32xf32>,
    %c0_20 = arith.constant 0 : index
    %c0_21 = arith.constant 0 : index
    %31 = vector.load %arg5[%c0_20, %c0_21] : memref<8x1xf32, #tpu.memory_space<vmem>>, vector<8x1xf32>
    tpu.vector_store %arg5[%c0_20, %c0_21], %12 {strides = array<i32>} : memref<8x1xf32, #tpu.memory_space<vmem>>, vector<8x1xf32>,
    %c0_i32_22 = arith.constant 0 : i32
    %32 = arith.cmpi eq, %arg1, %c0_i32_22 : i32
    %33 = arith.extui %32 : i1 to i32
    %c0_i32_23 = arith.constant 0 : i32
    %34 = arith.cmpi ne, %33, %c0_i32_23 : i32
    scf.if %34 {
      %c0_24 = arith.constant 0 : index
      %c0_25 = arith.constant 0 : index
      %35 = vector.load %arg7[%c0_24, %c0_25] : memref<8x32xf32, #tpu.memory_space<vmem>>, vector<8x32xf32>
      %c0_26 = arith.constant 0 : index
      %c0_27 = arith.constant 0 : index
      %36 = vector.load %arg6[%c0_26, %c0_27] : memref<8x1xf32, #tpu.memory_space<vmem>>, vector<8x1xf32>
      %37 = tpu.reciprocal %36 : vector<8x1xf32> -> vector<8x1xf32>
      %38 = vector.broadcast %37 : vector<8x1xf32> to vector<8x32xf32>
      %39 = arith.mulf %35, %38 : vector<8x32xf32>
      %cst_28 = arith.constant 0.000000e+00 : f32
      %40 = vector.broadcast %cst_28 : f32 to vector<8x32xf32>
      %41 = arith.maximumf %39, %40 : vector<8x32xf32>
      %c0_29 = arith.constant 0 : index
      %c0_30 = arith.constant 0 : index
      %c0_31 = arith.constant 0 : index
      %42 = vector.load %arg4[%c0_29, %c0_30, %c0_31] : memref<1x8x32xf32, #tpu.memory_space<vmem>>, vector<1x8x32xf32>
      %43 = vector.shape_cast %42 : vector<1x8x32xf32> to vector<8x32xf32>
      %44 = vector.shape_cast %41 : vector<8x32xf32> to vector<1x8x32xf32>
      tpu.vector_store %arg4[%c0_29, %c0_30, %c0_31], %44 {strides = array<i32>} : memref<1x8x32xf32, #tpu.memory_space<vmem>>, vector<1x8x32xf32>,
    } else {
    }
    return
  }
  func.func @transform_0(%arg0: i32, %arg1: i32) -> (i32, i32, i32) {
    %c0_i32 = arith.constant 0 : i32
    %c0_i32_0 = arith.constant 0 : i32
    return %arg0, %c0_i32, %arg1 : i32, i32, i32
  }
  func.func @transform_1(%arg0: i32, %arg1: i32) -> (i32, i32) {
    %c0_i32 = arith.constant 0 : i32
    %c0_i32_0 = arith.constant 0 : i32
    %c0_i32_1 = arith.constant 0 : i32
    return %c0_i32, %c0_i32_0 : i32, i32
  }
  func.func @transform_2(%arg0: i32, %arg1: i32) -> (i32, i32, i32) {
    %c0_i32 = arith.constant 0 : i32
    %c0_i32_0 = arith.constant 0 : i32
    %c0_i32_1 = arith.constant 0 : i32
    return %arg0, %c0_i32, %c0_i32_0 : i32, i32, i32
  }
}

</mosaic_0001>

<llo_original>
// kernel: tpu_custom_call.1
$region0: #{tpu_custom_call.1}
  #allocation0 [shape = 'u32[]', space=smem, size = 0x4, offset = 0x4, fixed_abs, tag = 'smem constant byte address 0x4 - core index']
  #allocation1 [shape = 'u32[144,128]{1,0:T(1,128)}', space=vmem, size = 0x12000, scoped, tag = 'internal scratch']
  #allocation2 [shape = 'f32[8,1]{1,0:T(8,128)}', space=vmem, size = 0x1000, scoped, tag = 'scratch operand']
  #allocation3 [shape = 'f32[8,1]{1,0:T(8,128)}', space=vmem, size = 0x1000, scoped, tag = 'scratch operand']
  #allocation4 [shape = 'f32[8,32]{1,0:T(8,128)}', space=vmem, size = 0x1000, scoped, tag = 'scratch operand']
  %s0 = inlined_call_operand.vmem [shape: f32[2,32,64], index: 0, kind: input, shape index: {}]
  %s1 = inlined_call_operand.vmem [shape: f32[40,32], index: 1, kind: input, shape index: {}]
  %s2 = inlined_call_operand.hbm [shape: f32[2,8,32], index: 2, kind: output, shape index: {}]
  %s3 = sld [smem:[#allocation0]]
  $region49: #{tpu_custom_call.1} parent=0
    _
  %s5 = ssub.s32 1, %s3
  %s6 = scalar_select 0, %s5, %s3
  $region1: #{tpu_custom_call.1} parent=0
    #allocation5 [shape = 'u8[8192]{0}', space=vmem, size = 0x2000, scoped, tag = 'output window, operand 0']
    #allocation6 [shape = 's32[2]{0}', space=sflag, size = 0x8, scoped, tag = 'scoped memory for tpu_custom_call.1']
    %7 = vsyncpa [#allocation6], 0
    %s8 = scalar_lea.sflag [#allocation6], 1
    %9 = vsyncpa %s8, 0
    loop: start=0, step=1, limit=4
    $region2: #{tpu_custom_call.1} parent=1 // loop_pre_header
      _
    $region3: #{tpu_custom_call.1} parent=1 // loop_header
      %s11 = sphi 0, %s15
      %p12 = scmp.ge.s32.totalorder %s11, 4
      %s18 = sphi 0, %s30
      %s19 = sphi 0, %s26
      %s20 = sphi 0, %s18
      %s21 = sphi 0, %s19
      %s22 = sphi 0, %s20
      %s23 = sphi 0, %s21
      %s35 = sphi 0, %s37
      %s38 = sphi 0, %s35
      %s39 = sphi 0, %s38
      %s55 = sphi 0, %s39
      %s59 = sphi 0, %s59
      %s61 = sphi 0, %s59
      %s62 = sphi 0, %s61
      %s76 = sphi 0, %s62
      %s82 = sphi 0, %s84
      %s85 = sphi 0, %s82
      %s86 = sphi 0, %s85
      %s102 = sphi 0, %s86
    $region4: #{tpu_custom_call.1} parent=1 // loop_header_branch
      %14 = sbr.rel (%p12) target = $region8
    $region5: #{tpu_custom_call.1} parent=1 // loop_body
      %s16 = ssub.s32 %s11, 1
      %s17 = ssub.s32 %s11, 2
      %s24 = sadd.s32 1, %s19
      %p25 = scmp.ge.s32.totalorder %s24, 1
      %s26 = scalar_select %p25, 0, %s24
      %s27 = sadd.s32 1, %s18
      %s28 = scalar_select %p25, %s27, %s18
      %p29 = scmp.ge.s32.totalorder %s28, 2
      %s30 = scalar_select %p29, 0, %s28
      %s31 = ssub.s32 %s18, %s30
      %s32 = ssub.s32 %s19, %s26
      %s33 = sor.u32 %s31, %s32
      %p34 = scmp.eq.s32.totalorder %s33, 0
      %s36 = sadd.s32 %s35, 1
      %s37 = scalar_select %p34, %s35, %s36
      %p40 = pneg %p34
      %p41 = scmp.eq.s32.totalorder %s11, 1
      %p42 = por %p40, %p41
      %p43 = scmp.ne.s32.totalorder %s35, %s38
      %p44 = scmp.eq.s32.totalorder %s11, 0
      %p45 = por %p43, %p44
      %p46 = scmp.ne.s32.totalorder %s35, %s38
      %p47 = scmp.eq.s32.totalorder %s16, 1
      %p48 = por %p46, %p47
      %p49 = scmp.ne.s32.totalorder %s38, %s39
      %p50 = scmp.eq.s32.totalorder %s16, 0
      %p51 = por %p49, %p50
      %p52 = scmp.ne.s32.totalorder %s38, %s39
      %p53 = scmp.eq.s32.totalorder %s17, 1
      %p54 = por %p52, %p53
      %p56 = scmp.ne.s32.totalorder %s39, %s55
      %p57 = scmp.eq.s32.totalorder %s17, 0
      %p58 = por %p56, %p57
      %s60 = sadd.s32 %s59, 1
      %p63 = scmp.eq.s32.totalorder %s11, 1
      %p64 = scmp.ne.s32.totalorder %s59, %s61
      %p65 = scmp.eq.s32.totalorder %s11, 0
      %p66 = por %p64, %p65
      %p67 = scmp.ne.s32.totalorder %s59, %s61
      %p68 = scmp.eq.s32.totalorder %s16, 1
      %p69 = por %p67, %p68
      %p70 = scmp.ne.s32.totalorder %s61, %s62
      %p71 = scmp.eq.s32.totalorder %s16, 0
      %p72 = por %p70, %p71
      %p73 = scmp.ne.s32.totalorder %s61, %s62
      %p74 = scmp.eq.s32.totalorder %s17, 1
      %p75 = por %p73, %p74
      %p77 = scmp.ne.s32.totalorder %s62, %s76
      %p78 = scmp.eq.s32.totalorder %s17, 0
      %p79 = por %p77, %p78
      %s80 = ssub.s32 %s18, %s30
      %p81 = scmp.eq.s32.totalorder %s80, 0
      %s83 = sadd.s32 %s82, 1
      %s84 = scalar_select %p81, %s82, %s83
      %p87 = pneg %p81
      %p88 = scmp.eq.s32.totalorder %s11, 1
      %p89 = por %p87, %p88
      %p90 = scmp.ne.s32.totalorder %s82, %s85
      %p91 = scmp.eq.s32.totalorder %s11, 0
      %p92 = por %p90, %p91
      %p93 = scmp.ne.s32.totalorder %s82, %s85
      %p94 = scmp.eq.s32.totalorder %s16, 1
      %p95 = por %p93, %p94
      %p96 = scmp.ne.s32.totalorder %s85, %s86
      %p97 = scmp.eq.s32.totalorder %s16, 0
      %p98 = por %p96, %p97
      %p99 = scmp.ne.s32.totalorder %s85, %s86
      %p100 = scmp.eq.s32.totalorder %s17, 1
      %p101 = por %p99, %p100
      %p103 = scmp.ne.s32.totalorder %s86, %s102
      %p104 = scmp.eq.s32.totalorder %s17, 0
      %p105 = por %p103, %p104
      %p106 = scmp.le.s32.totalorder 1, %s11
      %p107 = scmp.lt.s32.totalorder %s11, 3
      %p108 = pnand %p106, %p107
      %p109 = pneg %p108
      // Predicated region
      $region9: #{tpu_custom_call.1} parent=5 // pred_check
        _
      $region10: #{tpu_custom_call.1} parent=5 // pred_check_branch
        %111 = sbr.rel (%p108) target = $region12
      $region11: #{tpu_custom_call.1} parent=5 // pred_region
        %s112 = ssub.s32 %s11, 1
        // Predicated region
        $region13: #{tpu_custom_call.1} parent=11 // pred_check
          %p113 = pneg %p72
        $region14: #{tpu_custom_call.1} parent=11 // pred_check_branch
          %115 = sbr.rel (%p113) target = $region16
        $region15: #{tpu_custom_call.1} parent=11 // pred_region
          _
        $region16: #{tpu_custom_call.1} parent=11 // pred_fallthru
          _
      $region12: #{tpu_custom_call.1} parent=5 // pred_fallthru
        _
      %p116 = scmp.lt.s32.totalorder %s11, 2
      // Predicated region
      $region17: #{tpu_custom_call.1} parent=5 // pred_check
        %p117 = pneg %p116
      $region18: #{tpu_custom_call.1} parent=5 // pred_check_branch
        %119 = sbr.rel (%p117) target = $region20
      $region19: #{tpu_custom_call.1} parent=5 // pred_region
        // Predicated region
        $region21: #{tpu_custom_call.1} parent=19 // pred_check
          %p120 = pneg %p45
        $region22: #{tpu_custom_call.1} parent=19 // pred_check_branch
          %122 = sbr.rel (%p120) target = $region24
        $region23: #{tpu_custom_call.1} parent=19 // pred_region
          %p123 = scmp.lt.s32.totalorder %s18, 1
          %s124 = scalar_select %p123, %s18, 1
          %p125 = scmp.lt.s32.totalorder %s19, 0
          %s126 = scalar_select %p125, %s19, 0
          %s127 = smul.addr %s124, 4
          %s128 = sadd.s32 %s126, %s127
          %s129 = smul.addr %s128, 8
          %s130 = scalar_lea.vmem %s0, %s129
        $region24: #{tpu_custom_call.1} parent=19 // pred_fallthru
          _
      $region20: #{tpu_custom_call.1} parent=5 // pred_fallthru
        _
      %p131 = scmp.le.s32.totalorder 1, %s11
      %p132 = scmp.lt.s32.totalorder %s11, 3
      %p133 = pnand %p131, %p132
      %p134 = pneg %p133
      // Predicated region
      $region25: #{tpu_custom_call.1} parent=5 // pred_check
        _
      $region26: #{tpu_custom_call.1} parent=5 // pred_check_branch
        %136 = sbr.rel (%p133) target = $region28
      $region27: #{tpu_custom_call.1} parent=5 // pred_region
        %s137 = ssub.s32 %s11, 1
        %p138 = scmp.lt.s32.totalorder %s20, 1
        %s139 = scalar_select %p138, %s20, 1
        %p140 = scmp.lt.s32.totalorder %s21, 0
        %s141 = scalar_select %p140, %s21, 0
        %s142 = smul.addr %s139, 4
        %s143 = sadd.s32 %s141, %s142
        %s144 = smul.addr %s143, 8
        %s145 = scalar_lea.vmem %s0, %s144
        %p146 = pneg %p51
        %p147 = pneg %p48
        %p148 = pneg %p72
        %p149 = pneg %p69
        %p150 = pneg %p98
        %p151 = pneg %p95
        %s152 = sand.u32 %s85, 1
        %s153 = scalar_lea.sflag [#allocation6], %s152
        %s154 = sand.u32 %s85, 1
        %s155 = smul.addr %s154, 8
        %s156 = scalar_lea.vmem [#allocation5], %s155
        %p157 = scmp.lt.s32.totalorder %s20, 1
        %s158 = scalar_select %p157, %s20, 1
        %p159 = scmp.lt.s32.totalorder %s21, 0
        %s160 = scalar_select %p159, %s21, 0
        %s161 = smul.addr %s158, 4
        %s162 = sadd.s32 %s160, %s161
        %s163 = smul.addr %s162, 8
        %s164 = scalar_lea.vmem %s0, %s163
        %p165 = scmp.eq.s32.totalorder %s21, 0
        // Predicated region
        $region29: #{tpu_custom_call.1} parent=27 // pred_check
          %p166 = pneg %p165
        $region30: #{tpu_custom_call.1} parent=27 // pred_check_branch
          %168 = sbr.rel (%p166) target = $region32
        $region31: #{tpu_custom_call.1} parent=27 // pred_region
          %vm169 = vcmask 7168
          %170 = vst.msk [vmem:[#allocation2] sm:$0xff] %vm169, -inf
          %171 = vst.msk [vmem:[#allocation3] sm:$0xff] %vm169, 0.0
          %vm172 = vcmask 261120
          %173 = vst.msk [vmem:[#allocation4] sm:$0xff] %vm172, 0.0
        $region32: #{tpu_custom_call.1} parent=27 // pred_fallthru
          _
        %v174 = vld [vmem:[%s164] sm:$0xff]
        %v175 = vld [vmem:[%s164 + $0x8] sm:$0xff]
        %v176 = vld [vmem:[%s164 + $0x10] sm:$0xff]
        %v177 = vld [vmem:[%s164 + $0x18] sm:$0xff]
        %v178 = vld [vmem:[%s1] sm:$0xff]
        %v179 = vld [vmem:[%s1 + $0x8] sm:$0xff]
        %v180 = vld [vmem:[%s1 + $0x10] sm:$0xff]
        %v181 = vld [vmem:[%s1 + $0x18] sm:$0xff]
        %v182 = vld [vmem:[%s1 + $0x20] sm:$0xff]
        %vm183 = vcmask 261120
        %v185 = vsel %vm183, %v178, 0
        %v188 = vsel %vm183, %v179, 0
        %v191 = vsel %vm183, %v180, 0
        %v194 = vsel %vm183, %v181, 0
        %v197 = vsel %vm183, %v182, 0
        %199 = vmatprep.subr.mxu0 0.0
        %200 = vmatpush1.msra.mxu0 0.0
        %201 = vmatprep.subr.mxu0 0.0
        %202 = vmatpush1.msra.mxu0 0.0
        %203 = vmatprep.subr.mxu0 0.0
        %204 = vmatpush1.msra.mxu0 0.0
        %205 = vmatprep.subr.mxu0 0.0
        %206 = vmatpush1.msra.mxu0 0.0
        %207 = vmatprep.subr.mxu0 0.0
        %208 = vmatpush1.msra.mxu0 0.0
        %209 = vmatprep.subr.mxu0 0.0
        %210 = vmatpush1.msra.mxu0 0.0
        %211 = vmatprep.subr.mxu0 0.0
        %212 = vmatpush1.msra.mxu0 0.0
        %213 = vmatprep.subr.mxu0 0.0
        %214 = vmatpush1.msra.mxu0 0.0
        %215 = vmatprep.subr.mxu0 0.0
        %216 = vmatpush1.msra.mxu0 0.0
        %217 = vmatprep.subr.mxu0 0.0
        %218 = vmatpush1.msra.mxu0 0.0
        %219 = vmatprep.subr.mxu0 0.0
        %220 = vmatpush1.msra.mxu0 0.0
        %221 = vmatprep.subr.mxu0 0.0
        %222 = vmatpush1.msra.mxu0 0.0
        %223 = vmatprep.subr.mxu0 0.0
        %224 = vmatpush1.msra.mxu0 %v177
        %225 = vmatprep.subr.mxu0 0.0
        %226 = vmatpush1.msra.mxu0 %v176
        %227 = vmatprep.subr.mxu0 0.0
        %228 = vmatpush1.msra.mxu0 %v175
        %229 = vmatprep.subr.mxu0 0.0
        %230 = vmatpush1.msra.mxu0 %v174
        %231 = vmatprep.subr.mxu0 0.0
        %232 = vmatpush2.msra.mxu0 0.0
        %233 = vmatprep.subr.mxu0 0.0
        %234 = vmatpush2.msra.mxu0 0.0
        %235 = vmatprep.subr.mxu0 0.0
        %236 = vmatpush2.msra.mxu0 0.0
        %237 = vmatprep.subr.mxu0 0.0
        %238 = vmatpush2.msra.mxu0 0.0
        %239 = vmatprep.subr.mxu0 0.0
        %240 = vmatpush2.msra.mxu0 0.0
        %241 = vmatprep.subr.mxu0 0.0
        %242 = vmatpush2.msra.mxu0 0.0
        %243 = vmatprep.subr.mxu0 0.0
        %244 = vmatpush2.msra.mxu0 0.0
        %245 = vmatprep.subr.mxu0 0.0
        %246 = vmatpush2.msra.mxu0 0.0
        %247 = vmatprep.subr.mxu0 0.0
        %248 = vmatpush2.msra.mxu0 0.0
        %249 = vmatprep.subr.mxu0 0.0
        %250 = vmatpush2.msra.mxu0 0.0
        %251 = vmatprep.subr.mxu0 0.0
        %252 = vmatpush2.msra.mxu0 0.0
        %253 = vmatprep.subr.mxu0 0.0
        %254 = vmatpush2.msra.mxu0 0.0
        %255 = vmatprep.subr.mxu0 0.0
        %256 = vmatpush2.msra.mxu0 0.0
        %257 = vmatprep.subr.mxu0 0.0
        %258 = vmatpush2.msra.mxu0 0.0
        %259 = vmatprep.subr.mxu0 0.0
        %260 = vmatpush2.msra.mxu0 0.0
        %261 = vmatprep.subr.mxu0 0.0
        %262 = vmatpush2.msra.mxu0 0.0
        %263 = vmatprep.mubr.f32.mxu0 0.0
        %264 = vmatmul.mubr.f32.gmra.mxu0 %v185
        %v265 = vpop.f32.mrf.mxu0
        %v266 = vadd.f32 0.0, %v265
        %v267 = vpop.f32.mrf.mxu0
        %268 = vmatprep.mubr.f32.mxu0 0.0
        %269 = vmatmul.mubr.f32.gmra.mxu0 %v188
        %v270 = vpop.f32.mrf.mxu0
        %v271 = vadd.f32 0.0, %v270
        %v272 = vpop.f32.mrf.mxu0
        %273 = vmatprep.mubr.f32.mxu0 0.0
        %274 = vmatmul.mubr.f32.gmra.mxu0 %v191
        %v275 = vpop.f32.mrf.mxu0
        %v276 = vadd.f32 0.0, %v275
        %v277 = vpop.f32.mrf.mxu0
        %278 = vmatprep.mubr.f32.mxu0 0.0
        %279 = vmatmul.mubr.f32.gmra.mxu0 %v194
        %v280 = vpop.f32.mrf.mxu0
        %v281 = vadd.f32 0.0, %v280
        %v282 = vpop.f32.mrf.mxu0
        %283 = vmatprep.mubr.f32.mxu0 0.0
        %284 = vmatmul.mubr.f32.gmra.mxu0 %v197
        %v285 = vpop.f32.mrf.mxu0
        %v286 = vadd.f32 0.0, %v285
        %v287 = vpop.f32.mrf.mxu0
        %288 = vdwg.mxu0
        %v289 = vld [vmem:[#allocation2] sm:$0xff]
        %vm290 = vcmask 523264
        %v291 = vsel %vm290, %v266, -inf
        %292 = vmax.xlane.f32.xlu0 %v291
        %v293 = vpop.xlane.xlu0 %292
        %v294 = vmax.f32 %v289, %v293
        %v295 = vsub.f32 %v289, %v294
        %v296 = vmul.f32 %v295, 1.442695
        %v297 = vpow.pop %v296
        %299 = vset.pattern.permute.xlu0 0
        %300 = vperm.xlu0 %299, %v294
        %v301 = vpop.permute.xlu0 %300
        %v303 = vsub.f32 %v266, %v301
        %v304 = vmul.f32 %v303, 1.442695
        %v305 = vpow.pop %v304
        %v306 = vld [vmem:[#allocation3] sm:$0xff]
        %v307 = vmul.f32 %v297, %v306
        %v308 = vsel %vm290, %v305, 0.0
        %309 = vadd.xlane.f32.xlu0 %v308
        %v310 = vpop.xlane.xlu0 %309
        %v311 = vadd.f32 %v307, %v310
        %vm312 = vcmask 7168
        %313 = vst.msk [vmem:[#allocation3] sm:$0xff] %vm312, %v311
        %v314 = vld [vmem:[#allocation4] sm:$0xff]
        %316 = vset.pattern.permute.xlu0 0
        %317 = vperm.xlu0 %316, %v297
        %v318 = vpop.permute.xlu0 %317
        %v320 = vmul.f32 %v318, %v314
        %v322 = vsel %vm290, %v305, 0
        %v325 = vsel %vm290, %v271, 0
        %v328 = vsel %vm290, %v276, 0
        %v331 = vsel %vm290, %v281, 0
        %v334 = vsel %vm290, %v286, 0
        %336 = vmatprep.subr.mxu0 0.0
        %337 = vmatpush1.xpose.msra.mxu0 0.0
        %338 = vmatprep.subr.mxu0 0.0
        %339 = vmatpush1.xpose.msra.mxu0 0.0
        %340 = vmatprep.subr.mxu0 0.0
        %341 = vmatpush1.xpose.msra.mxu0 0.0
        %342 = vmatprep.subr.mxu0 0.0
        %343 = vmatpush1.xpose.msra.mxu0 0.0
        %344 = vmatprep.subr.mxu0 0.0
        %345 = vmatpush1.xpose.msra.mxu0 0.0
        %346 = vmatprep.subr.mxu0 0.0
        %347 = vmatpush1.xpose.msra.mxu0 0.0
        %348 = vmatprep.subr.mxu0 0.0
        %349 = vmatpush1.xpose.msra.mxu0 0.0
        %350 = vmatprep.subr.mxu0 0.0
        %351 = vmatpush1.xpose.msra.mxu0 0.0
        %352 = vmatprep.subr.mxu0 0.0
        %353 = vmatpush1.xpose.msra.mxu0 0.0
        %354 = vmatprep.subr.mxu0 0.0
        %355 = vmatpush1.xpose.msra.mxu0 0.0
        %356 = vmatprep.subr.mxu0 0.0
        %357 = vmatpush1.xpose.msra.mxu0 0.0
        %358 = vmatprep.subr.mxu0 0.0
        %359 = vmatpush1.xpose.msra.mxu0 0.0
        %360 = vmatprep.subr.mxu0 0.0
        %361 = vmatpush1.xpose.msra.mxu0 %v334
        %362 = vmatprep.subr.mxu0 0.0
        %363 = vmatpush1.xpose.msra.mxu0 %v331
        %364 = vmatprep.subr.mxu0 0.0
        %365 = vmatpush1.xpose.msra.mxu0 %v328
        %366 = vmatprep.subr.mxu0 0.0
        %367 = vmatpush1.xpose.msra.mxu0 %v325
        %368 = vmatprep.subr.mxu0 0.0
        %369 = vmatpush2.xpose.msra.mxu0 0.0
        %370 = vmatprep.subr.mxu0 0.0
        %371 = vmatpush2.xpose.msra.mxu0 0.0
        %372 = vmatprep.subr.mxu0 0.0
        %373 = vmatpush2.xpose.msra.mxu0 0.0
        %374 = vmatprep.subr.mxu0 0.0
        %375 = vmatpush2.xpose.msra.mxu0 0.0
        %376 = vmatprep.subr.mxu0 0.0
        %377 = vmatpush2.xpose.msra.mxu0 0.0
        %378 = vmatprep.subr.mxu0 0.0
        %379 = vmatpush2.xpose.msra.mxu0 0.0
        %380 = vmatprep.subr.mxu0 0.0
        %381 = vmatpush2.xpose.msra.mxu0 0.0
        %382 = vmatprep.subr.mxu0 0.0
        %383 = vmatpush2.xpose.msra.mxu0 0.0
        %384 = vmatprep.subr.mxu0 0.0
        %385 = vmatpush2.xpose.msra.mxu0 0.0
        %386 = vmatprep.subr.mxu0 0.0
        %387 = vmatpush2.xpose.msra.mxu0 0.0
        %388 = vmatprep.subr.mxu0 0.0
        %389 = vmatpush2.xpose.msra.mxu0 0.0
        %390 = vmatprep.subr.mxu0 0.0
        %391 = vmatpush2.xpose.msra.mxu0 0.0
        %392 = vmatprep.subr.mxu0 0.0
        %393 = vmatpush2.xpose.msra.mxu0 0.0
        %394 = vmatprep.subr.mxu0 0.0
        %395 = vmatpush2.xpose.msra.mxu0 0.0
        %396 = vmatprep.subr.mxu0 0.0
        %397 = vmatpush2.xpose.msra.mxu0 0.0
        %398 = vmatprep.subr.mxu0 0.0
        %399 = vmatpush2.xpose.msra.mxu0 0.0
        %400 = vmatprep.mubr.f32.mxu0 0.0
        %401 = vmatmul.mubr.f32.gmra.mxu0 %v322
        %v402 = vpop.f32.mrf.mxu0
        %v403 = vadd.f32 0.0, %v402
        %v404 = vpop.f32.mrf.mxu0
        %405 = vdwg.mxu0
        %v406 = vadd.f32 %v320, %v403
        %407 = vst.msk [vmem:[#allocation4] sm:$0xff] %vm183, %v406
        %408 = vst.msk [vmem:[#allocation2] sm:$0xff] %vm312, %v294
        // Predicated region
        $region33: #{tpu_custom_call.1} parent=27 // pred_check
          %p409 = pneg %p165
        $region34: #{tpu_custom_call.1} parent=27 // pred_check_branch
          %411 = sbr.rel (%p409) target = $region36
        $region35: #{tpu_custom_call.1} parent=27 // pred_region
          %v412 = vld [vmem:[#allocation4] sm:$0xff]
          %v413 = vld [vmem:[#allocation3] sm:$0xff]
          %v414 = vrcp.pop %v413
          %416 = vset.pattern.permute.xlu0 0
          %417 = vperm.xlu0 %416, %v414
          %v418 = vpop.permute.xlu0 %417
          %v420 = vmul.f32 %v412, %v418
          %v421 = vmax.f32 %v420, 0.0
          %422 = vst.msk [vmem:[%s156] sm:$0xff] %vm183, %v421
        $region36: #{tpu_custom_call.1} parent=27 // pred_fallthru
          _
        %s423 = sand.u32 %s85, 1
        %s424 = scalar_lea.sflag [#allocation6], %s423
        %s425 = sand.u32 %s85, 1
        %s426 = smul.addr %s425, 8
        %s427 = scalar_lea.vmem [#allocation5], %s426
        // Predicated region
        $region37: #{tpu_custom_call.1} parent=27 // pred_check
          %p428 = pneg %p95
        $region38: #{tpu_custom_call.1} parent=27 // pred_check_branch
          %430 = sbr.rel (%p428) target = $region40
        $region39: #{tpu_custom_call.1} parent=27 // pred_region
          %s432 = ssub.s32 128, 128
          %433 = vsyncadd %s424, %s432
          %s434 = smul.addr %s20, 128
          %s435 = scalar_lea.hbm %s2, %s434
          %s437 = sshll.u32 %s427, 4
          %s438 = int_to_ptr.vmem [resolvable:$true] %s437
          %440 = dma.vmem_to_hbm [thread:$0]  %s438, 128, %s435, %s424
        $region40: #{tpu_custom_call.1} parent=27 // pred_fallthru
          _
      $region28: #{tpu_custom_call.1} parent=5 // pred_fallthru
        _
      %p441 = scmp.le.s32.totalorder 2, %s11
      // Predicated region
      $region41: #{tpu_custom_call.1} parent=5 // pred_check
        %p442 = pneg %p441
      $region42: #{tpu_custom_call.1} parent=5 // pred_check_branch
        %444 = sbr.rel (%p442) target = $region44
      $region43: #{tpu_custom_call.1} parent=5 // pred_region
        %s445 = ssub.s32 %s11, 2
        // Predicated region
        $region45: #{tpu_custom_call.1} parent=43 // pred_check
          %p446 = pneg %p101
        $region46: #{tpu_custom_call.1} parent=43 // pred_check_branch
          %448 = sbr.rel (%p446) target = $region48
        $region47: #{tpu_custom_call.1} parent=43 // pred_region
          %s449 = sand.u32 %s86, 1
          %s450 = scalar_lea.sflag [#allocation6], %s449
          %s451 = sand.u32 %s86, 1
          %s452 = smul.addr %s451, 8
          %s453 = scalar_lea.vmem [#allocation5], %s452
          %454 = dma.done %s450, 128
        $region48: #{tpu_custom_call.1} parent=43 // pred_fallthru
          _
      $region44: #{tpu_custom_call.1} parent=5 // pred_fallthru
        _
    $region6: #{tpu_custom_call.1} parent=1 // loop_footer
      %s15 = sadd.s32 1, %s11
    $region7: #{tpu_custom_call.1} parent=1 // loop_footer_branch
      %10 = sbr.rel target = $region3
    $region8: #{tpu_custom_call.1} parent=1 // loop_exit
      _
    %455 = vsyncpa [#allocation6], 1
    %s456 = scalar_lea.sflag [#allocation6], 1
    %457 = vsyncpa %s456, 1

</llo_original>
